<compile_context>
chip_gen: v7x
topology: tpu7x:2x2x1
jax: 0.10.0
libtpu: 0.0.40
codegen_flags: <defaults>
</compile_context>

<pallas_src>
import functools

import numpy as np

import jax
import jax.numpy as jnp
from jax.experimental import pallas as pl
from jax.experimental.pallas import tpu as pltpu


def _scse_kernel(x_ref, masks_ref, w3_ref, b3_ref, w1_ref, b1_ref, w2_ref, b2_ref,
                 w_out_ref, y_out_ref, patches_ref, *, H, W, C):
    """Processes one batch image.

    x_ref:       (C, H*W)      image, channels on sublanes, flattened spatial on lanes
    masks_ref:   (9, H*W)      0/1 border-validity mask per 3x3 tap
    w3_ref:      (C, 9*C)      3x3 conv weight, [c_out, (ky*3+kx)*C + c_in]
    b3_ref:      (C, 1)
    w1_ref:      (Cr, C)       1x1 squeeze conv  (c_out, c_in)
    b1_ref:      (Cr, 1)
    w2_ref:      (C, Cr)       1x1 excite conv
    b2_ref:      (C, 1)
    outputs:     (C, H*W) each
    patches_ref: (9*C, H*W)    VMEM scratch for the im2col matrix
    """
    HW = H * W
    x = x_ref[...]                                               # (C, HW) f32

    # ---- sSE branch: 3x3 conv (padding=1) as ONE im2col matmul -------------
    # Each tap is a lane-roll of the flattened image; zero-padding at the image
    # border is applied with a precomputed 0/1 mask (handles the roll wrap too).
    for k in range(9):
        ky, kx = divmod(k, 3)
        dy, dx = ky - 1, kx - 1
        shift = (-(dy * W + dx)) % HW
        tap = x if shift == 0 else pltpu.roll(x, shift=shift, axis=1)
        if not (dy == 0 and dx == 0):
            tap = tap * masks_ref[pl.ds(k, 1), :]                # (1,HW) broadcast
        patches_ref[pl.ds(k * C, C), :] = tap

    conv = jnp.dot(w3_ref[...], patches_ref[...],
                   preferred_element_type=jnp.float32)           # (C, HW)
    sse = jax.nn.sigmoid(conv + b3_ref[...])

    # ---- cSE branch: GAP -> 1x1 conv -> LeakyReLU -> 1x1 conv -> sigmoid ----
    pooled = jnp.mean(x, axis=1, keepdims=True)                  # (C, 1)
    h1 = jnp.dot(w1_ref[...], pooled,
                 preferred_element_type=jnp.float32) + b1_ref[...]
    h1 = jnp.where(h1 > 0, h1, 0.01 * h1)                        # LeakyReLU(0.01)
    cse = jax.nn.sigmoid(
        jnp.dot(w2_ref[...], h1, preferred_element_type=jnp.float32) + b2_ref[...])

    # ---- combine and channel-argmax mask ------------------------------------
    y = x * (cse + sse)                                          # (C, HW)
    ymax = jnp.max(y, axis=0, keepdims=True)                     # (1, HW) sublane reduce
    y_out_ref[...] = y
    w_out_ref[...] = (y == ymax).astype(jnp.float32)


def _border_masks(H, W):
    """mask[k, y, x] = 1 iff the 3x3 tap k=(ky,kx) reads inside the image at (y,x)."""
    m = np.zeros((9, H, W), np.float32)
    for k in range(9):
        ky, kx = divmod(k, 3)
        dy, dx = ky - 1, kx - 1
        m[k, max(0, -dy):min(H, H - dy), max(0, -dx):min(W, W - dx)] = 1.0
    return jnp.asarray(m.reshape(9, H * W))


def scse_mask_forward(x_nchw, params):
    """x_nchw: (N, C, H, W) float32.  Returns (w, y), both (N, C, H, W)."""
    N, C, H, W = x_nchw.shape
    HW = H * W
    Cr = params["w1"].shape[0]

    # Free reshapes only: no transpose, no padding outside the kernel.
    x = x_nchw.reshape(N, C, HW).astype(jnp.float32)
    masks = _border_masks(H, W)
    w3 = params["w3"].reshape(C, 9 * C)          # (C_out, ky, kx, C_in) -> (C_out, 9*C_in)
    b3 = params["b3"].reshape(C, 1)
    w1 = params["w1"]
    b1 = params["b1"].reshape(Cr, 1)
    w2 = params["w2"]
    b2 = params["b2"].reshape(C, 1)

    kernel = functools.partial(_scse_kernel, H=H, W=W, C=C)

    # VMEM budget from the actual footprint (double-buffered image/out blocks,
    # weights, masks, im2col scratch), with generous headroom.
    block_b = 4 * C * HW
    need = (2 * 3 * block_b                      # x + 2 outputs, double-buffered
            + 4 * (9 * C * HW)                   # im2col scratch
            + 4 * (9 * HW)                       # border masks
            + 4 * (9 * C * C + 3 * C + 2 * Cr * C + Cr))
    vmem_limit = int(min(max(4 * need, 16 * 1024 * 1024), 64 * 1024 * 1024))

    grid_spec = pltpu.PrefetchScalarGridSpec(
        num_scalar_prefetch=0,
        grid=(N,),
        in_specs=[
            pl.BlockSpec((None, C, HW), lambda b: (b, 0, 0)),
            pl.BlockSpec((9, HW), lambda b: (0, 0)),
            pl.BlockSpec((C, 9 * C), lambda b: (0, 0)),
            pl.BlockSpec((C, 1), lambda b: (0, 0)),
            pl.BlockSpec((Cr, C), lambda b: (0, 0)),
            pl.BlockSpec((Cr, 1), lambda b: (0, 0)),
            pl.BlockSpec((C, Cr), lambda b: (0, 0)),
            pl.BlockSpec((C, 1), lambda b: (0, 0)),
        ],
        out_specs=(
            pl.BlockSpec((None, C, HW), lambda b: (b, 0, 0)),
            pl.BlockSpec((None, C, HW), lambda b: (b, 0, 0)),
        ),
        scratch_shapes=[pltpu.VMEM((9 * C, HW), jnp.float32)],
    )

    w_out, y_out = pl.pallas_call(
        kernel,
        out_shape=(jax.ShapeDtypeStruct((N, C, HW), jnp.float32),
                   jax.ShapeDtypeStruct((N, C, HW), jnp.float32)),
        grid_spec=grid_spec,
        compiler_params=pltpu.CompilerParams(
            dimension_semantics=("parallel",),
            vmem_limit_bytes=vmem_limit),
    )(x, masks, w3, b3, w1, b1, w2, b2)

    return w_out.reshape(N, C, H, W), y_out.reshape(N, C, H, W)


def init_params(key, C, reduction=2):
    Cr = C // reduction
    k1, k2, k3, k4, k5, k6 = jax.random.split(key, 6)
    return {
        # 3x3 conv weight stored as (C_out, ky, kx, C_in); bias (C,)
        "w3": 0.3 * jax.random.normal(k1, (C, 3, 3, C), jnp.float32),
        "b3": 0.1 * jax.random.normal(k2, (C,), jnp.float32),
        # cSE squeeze / excite 1x1 convs as (C_out, C_in) matrices
        "w1": 0.5 * jax.random.normal(k3, (Cr, C), jnp.float32),
        "b1": 0.1 * jax.random.normal(k4, (Cr,), jnp.float32),
        "w2": 0.5 * jax.random.normal(k5, (C, Cr), jnp.float32),
        "b2": 0.1 * jax.random.normal(k6, (C,), jnp.float32),
    }


def ref_forward_nchw(x, p):
    """Pure-JAX (XLA) reference of the same math, NCHW, default precision."""
    N, C, H, W = x.shape
    pooled = x.mean(axis=(2, 3))                                 # (N, C)
    h1 = pooled @ p["w1"].T + p["b1"]                            # (N, Cr)
    h1 = jnp.where(h1 > 0, h1, 0.01 * h1)
    cse = jax.nn.sigmoid(h1 @ p["w2"].T + p["b2"])               # (N, C)
    wconv = jnp.transpose(p["w3"], (0, 3, 1, 2))                 # OIHW
    conv = jax.lax.conv_general_dilated(
        x, wconv, (1, 1), "SAME",
        dimension_numbers=("NCHW", "OIHW", "NCHW"))
    sse = jax.nn.sigmoid(conv + p["b3"].reshape(1, C, 1, 1))
    y = x * cse[:, :, None, None] + x * sse
    w = (y == jnp.max(y, axis=1, keepdims=True)).astype(jnp.float32)
    return w, y


if __name__ == "__main__":
    key = jax.random.PRNGKey(0)
    kx, kp = jax.random.split(key)

    N, C, H, W = 2, 4, 16, 16
    x = jax.random.normal(kx, (N, C, H, W), jnp.float32)
    params = init_params(kp, C, reduction=2)

    w_k, y_k = jax.jit(scse_mask_forward)(x, params)
    jax.block_until_ready((w_k, y_k))

    # Sanity checks against a plain-JAX reference.
    w_ref, y_ref = ref_forward_nchw(x, params)
    assert y_k.shape == (N, C, H, W) and w_k.shape == (N, C, H, W)
    assert jnp.allclose(y_k, y_ref, atol=2e-2, rtol=2e-2), "y mismatch vs reference"
    w_check = (y_k == jnp.max(y_k, axis=1, keepdims=True)).astype(jnp.float32)
    assert jnp.array_equal(w_k, w_check), "w (channel-argmax mask) mismatch"

    print("KERNEL_OK")
</pallas_src>

<mosaic_0001>
module attributes {stable_mosaic.version = 11 : i64} {
  func.func @_scse_kernel(%arg0: i32, %arg1: memref<1x4x256xf32, #tpu.memory_space<vmem>>, %arg2: memref<9x256xf32, #tpu.memory_space<vmem>>, %arg3: memref<4x36xf32, #tpu.memory_space<vmem>>, %arg4: memref<4x1xf32, #tpu.memory_space<vmem>>, %arg5: memref<2x4xf32, #tpu.memory_space<vmem>>, %arg6: memref<2x1xf32, #tpu.memory_space<vmem>>, %arg7: memref<4x2xf32, #tpu.memory_space<vmem>>, %arg8: memref<4x1xf32, #tpu.memory_space<vmem>>, %arg9: memref<1x4x256xf32, #tpu.memory_space<vmem>>, %arg10: memref<1x4x256xf32, #tpu.memory_space<vmem>>, %arg11: memref<36x256xf32, #tpu.memory_space<vmem>>) attributes {dimension_semantics = [#tpu.dimension_semantics<parallel>], iteration_bounds = array<i64: 2>, scalar_prefetch = 0 : i64, scratch_operands = 1 : i64, tpu.core_type = #tpu.core_type<tc>, window_params = [{transform_indices = @transform_0, window_bounds = array<i64: 1, 4, 256>}, {pipeline_mode = #tpu.pipeline_mode<synchronous>, transform_indices = @transform_1, window_bounds = array<i64: 9, 256>}, {pipeline_mode = #tpu.pipeline_mode<synchronous>, transform_indices = @transform_2, window_bounds = array<i64: 4, 36>}, {pipeline_mode = #tpu.pipeline_mode<synchronous>, transform_indices = @transform_3, window_bounds = array<i64: 4, 1>}, {pipeline_mode = #tpu.pipeline_mode<synchronous>, transform_indices = @transform_4, window_bounds = array<i64: 2, 4>}, {pipeline_mode = #tpu.pipeline_mode<synchronous>, transform_indices = @transform_5, window_bounds = array<i64: 2, 1>}, {pipeline_mode = #tpu.pipeline_mode<synchronous>, transform_indices = @transform_6, window_bounds = array<i64: 4, 2>}, {pipeline_mode = #tpu.pipeline_mode<synchronous>, transform_indices = @transform_7, window_bounds = array<i64: 4, 1>}, {transform_indices = @transform_8, window_bounds = array<i64: 1, 4, 256>}, {transform_indices = @transform_9, window_bounds = array<i64: 1, 4, 256>}]} {
    %c0 = arith.constant 0 : index
    %c0_0 = arith.constant 0 : index
    %c0_1 = arith.constant 0 : index
    %0 = vector.load %arg1[%c0, %c0_0, %c0_1] : memref<1x4x256xf32, #tpu.memory_space<vmem>>, vector<1x4x256xf32>
    %1 = vector.shape_cast %0 : vector<1x4x256xf32> to vector<4x256xf32>
    %c17_i32 = arith.constant 17 : i32
    %2 = tpu.dynamic_rotate %1 by %c17_i32 dim 1 : vector<4x256xf32>, i32 -> vector<4x256xf32>
    %c0_2 = arith.constant 0 : index
    %c0_3 = arith.constant 0 : index
    %3 = vector.load %arg2[%c0_2, %c0_3] : memref<9x256xf32, #tpu.memory_space<vmem>>, vector<1x256xf32>
    %4 = vector.broadcast %3 : vector<1x256xf32> to vector<4x256xf32>
    %5 = arith.mulf %2, %4 : vector<4x256xf32>
    %c0_4 = arith.constant 0 : index
    %c0_5 = arith.constant 0 : index
    %6 = vector.load %arg11[%c0_4, %c0_5] : memref<36x256xf32, #tpu.memory_space<vmem>>, vector<4x256xf32>
    tpu.vector_store %arg11[%c0_4, %c0_5], %5 {strides = array<i32>} : memref<36x256xf32, #tpu.memory_space<vmem>>, vector<4x256xf32>,
    %c16_i32 = arith.constant 16 : i32
    %7 = tpu.dynamic_rotate %1 by %c16_i32 dim 1 : vector<4x256xf32>, i32 -> vector<4x256xf32>
    %c1 = arith.constant 1 : index
    %c0_6 = arith.constant 0 : index
    %8 = vector.load %arg2[%c1, %c0_6] : memref<9x256xf32, #tpu.memory_space<vmem>>, vector<1x256xf32>
    %9 = vector.broadcast %8 : vector<1x256xf32> to vector<4x256xf32>
    %10 = arith.mulf %7, %9 : vector<4x256xf32>
    %c4 = arith.constant 4 : index
    %c0_7 = arith.constant 0 : index
    %11 = vector.load %arg11[%c4, %c0_7] : memref<36x256xf32, #tpu.memory_space<vmem>>, vector<4x256xf32>
    tpu.vector_store %arg11[%c4, %c0_7], %10 {strides = array<i32>} : memref<36x256xf32, #tpu.memory_space<vmem>>, vector<4x256xf32>,
    %c15_i32 = arith.constant 15 : i32
    %12 = tpu.dynamic_rotate %1 by %c15_i32 dim 1 : vector<4x256xf32>, i32 -> vector<4x256xf32>
    %c2 = arith.constant 2 : index
    %c0_8 = arith.constant 0 : index
    %13 = vector.load %arg2[%c2, %c0_8] : memref<9x256xf32, #tpu.memory_space<vmem>>, vector<1x256xf32>
    %14 = vector.broadcast %13 : vector<1x256xf32> to vector<4x256xf32>
    %15 = arith.mulf %12, %14 : vector<4x256xf32>
    %c8 = arith.constant 8 : index
    %c0_9 = arith.constant 0 : index
    %16 = vector.load %arg11[%c8, %c0_9] : memref<36x256xf32, #tpu.memory_space<vmem>>, vector<4x256xf32>
    tpu.vector_store %arg11[%c8, %c0_9], %15 {strides = array<i32>} : memref<36x256xf32, #tpu.memory_space<vmem>>, vector<4x256xf32>,
    %c1_i32 = arith.constant 1 : i32
    %17 = tpu.dynamic_rotate %1 by %c1_i32 dim 1 : vector<4x256xf32>, i32 -> vector<4x256xf32>
    %c3 = arith.constant 3 : index
    %c0_10 = arith.constant 0 : index
    %18 = vector.load %arg2[%c3, %c0_10] : memref<9x256xf32, #tpu.memory_space<vmem>>, vector<1x256xf32>
    %19 = vector.broadcast %18 : vector<1x256xf32> to vector<4x256xf32>
    %20 = arith.mulf %17, %19 : vector<4x256xf32>
    %c12 = arith.constant 12 : index
    %c0_11 = arith.constant 0 : index
    %21 = vector.load %arg11[%c12, %c0_11] : memref<36x256xf32, #tpu.memory_space<vmem>>, vector<4x256xf32>
    tpu.vector_store %arg11[%c12, %c0_11], %20 {strides = array<i32>} : memref<36x256xf32, #tpu.memory_space<vmem>>, vector<4x256xf32>,
    %c16 = arith.constant 16 : index
    %c0_12 = arith.constant 0 : index
    %22 = vector.load %arg11[%c16, %c0_12] : memref<36x256xf32, #tpu.memory_space<vmem>>, vector<4x256xf32>
    tpu.vector_store %arg11[%c16, %c0_12], %1 {strides = array<i32>} : memref<36x256xf32, #tpu.memory_space<vmem>>, vector<4x256xf32>,
    %c255_i32 = arith.constant 255 : i32
    %23 = tpu.dynamic_rotate %1 by %c255_i32 dim 1 : vector<4x256xf32>, i32 -> vector<4x256xf32>
    %c5 = arith.constant 5 : index
    %c0_13 = arith.constant 0 : index
    %24 = vector.load %arg2[%c5, %c0_13] : memref<9x256xf32, #tpu.memory_space<vmem>>, vector<1x256xf32>
    %25 = vector.broadcast %24 : vector<1x256xf32> to vector<4x256xf32>
    %26 = arith.mulf %23, %25 : vector<4x256xf32>
    %c20 = arith.constant 20 : index
    %c0_14 = arith.constant 0 : index
    %27 = vector.load %arg11[%c20, %c0_14] : memref<36x256xf32, #tpu.memory_space<vmem>>, vector<4x256xf32>
    tpu.vector_store %arg11[%c20, %c0_14], %26 {strides = array<i32>} : memref<36x256xf32, #tpu.memory_space<vmem>>, vector<4x256xf32>,
    %c241_i32 = arith.constant 241 : i32
    %28 = tpu.dynamic_rotate %1 by %c241_i32 dim 1 : vector<4x256xf32>, i32 -> vector<4x256xf32>
    %c6 = arith.constant 6 : index
    %c0_15 = arith.constant 0 : index
    %29 = vector.load %arg2[%c6, %c0_15] : memref<9x256xf32, #tpu.memory_space<vmem>>, vector<1x256xf32>
    %30 = vector.broadcast %29 : vector<1x256xf32> to vector<4x256xf32>
    %31 = arith.mulf %28, %30 : vector<4x256xf32>
    %c24 = arith.constant 24 : index
    %c0_16 = arith.constant 0 : index
    %32 = vector.load %arg11[%c24, %c0_16] : memref<36x256xf32, #tpu.memory_space<vmem>>, vector<4x256xf32>
    tpu.vector_store %arg11[%c24, %c0_16], %31 {strides = array<i32>} : memref<36x256xf32, #tpu.memory_space<vmem>>, vector<4x256xf32>,
    %c240_i32 = arith.constant 240 : i32
    %33 = tpu.dynamic_rotate %1 by %c240_i32 dim 1 : vector<4x256xf32>, i32 -> vector<4x256xf32>
    %c7 = arith.constant 7 : index
    %c0_17 = arith.constant 0 : index
    %34 = vector.load %arg2[%c7, %c0_17] : memref<9x256xf32, #tpu.memory_space<vmem>>, vector<1x256xf32>
    %35 = vector.broadcast %34 : vector<1x256xf32> to vector<4x256xf32>
    %36 = arith.mulf %33, %35 : vector<4x256xf32>
    %c28 = arith.constant 28 : index
    %c0_18 = arith.constant 0 : index
    %37 = vector.load %arg11[%c28, %c0_18] : memref<36x256xf32, #tpu.memory_space<vmem>>, vector<4x256xf32>
    tpu.vector_store %arg11[%c28, %c0_18], %36 {strides = array<i32>} : memref<36x256xf32, #tpu.memory_space<vmem>>, vector<4x256xf32>,
    %c239_i32 = arith.constant 239 : i32
    %38 = tpu.dynamic_rotate %1 by %c239_i32 dim 1 : vector<4x256xf32>, i32 -> vector<4x256xf32>
    %c8_19 = arith.constant 8 : index
    %c0_20 = arith.constant 0 : index
    %39 = vector.load %arg2[%c8_19, %c0_20] : memref<9x256xf32, #tpu.memory_space<vmem>>, vector<1x256xf32>
    %40 = vector.broadcast %39 : vector<1x256xf32> to vector<4x256xf32>
    %41 = arith.mulf %38, %40 : vector<4x256xf32>
    %c32 = arith.constant 32 : index
    %c0_21 = arith.constant 0 : index
    %42 = vector.load %arg11[%c32, %c0_21] : memref<36x256xf32, #tpu.memory_space<vmem>>, vector<4x256xf32>
    tpu.vector_store %arg11[%c32, %c0_21], %41 {strides = array<i32>} : memref<36x256xf32, #tpu.memory_space<vmem>>, vector<4x256xf32>,
    %c0_22 = arith.constant 0 : index
    %c0_23 = arith.constant 0 : index
    %43 = vector.load %arg3[%c0_22, %c0_23] : memref<4x36xf32, #tpu.memory_space<vmem>>, vector<4x36xf32>
    %c0_24 = arith.constant 0 : index
    %c0_25 = arith.constant 0 : index
    %44 = vector.load %arg11[%c0_24, %c0_25] : memref<36x256xf32, #tpu.memory_space<vmem>>, vector<36x256xf32>
    %cst = arith.constant dense<0.000000e+00> : vector<4x256xf32>
    %45 = tpu.matmul %43, %44, %cst {dimension_numbers = #tpu.dot_dimension_numbers<[1], [0], [0], [1], [0, 0, 1, 1], [], []>} : vector<4x36xf32>, vector<36x256xf32>, vector<4x256xf32> -> vector<4x256xf32>
    %c0_26 = arith.constant 0 : index
    %c0_27 = arith.constant 0 : index
    %46 = vector.load %arg4[%c0_26, %c0_27] : memref<4x1xf32, #tpu.memory_space<vmem>>, vector<4x1xf32>
    %47 = vector.broadcast %46 : vector<4x1xf32> to vector<4x256xf32>
    %48 = arith.addf %45, %47 : vector<4x256xf32>
    %49 = arith.negf %48 : vector<4x256xf32>
    %50 = math.exp %49 : vector<4x256xf32>
    %cst_28 = arith.constant 1.000000e+00 : f32
    %51 = vector.broadcast %cst_28 : f32 to vector<4x256xf32>
    %52 = arith.addf %51, %50 : vector<4x256xf32>
    %53 = arith.divf %51, %52 : vector<4x256xf32>
    %cst_29 = arith.constant dense<0.000000e+00> : vector<4xf32>
    %54 = vector.multi_reduction <add>, %1, %cst_29 [1] : vector<4x256xf32> to vector<4xf32>
    %55 = vector.shape_cast %54 : vector<4xf32> to vector<4x1xf32>
    %cst_30 = arith.constant 2.560000e+02 : f32
    %56 = vector.broadcast %cst_30 : f32 to vector<4x1xf32>
    %57 = arith.divf %55, %56 : vector<4x1xf32>
    %c0_31 = arith.constant 0 : index
    %c0_32 = arith.constant 0 : index
    %58 = vector.load %arg5[%c0_31, %c0_32] : memref<2x4xf32, #tpu.memory_space<vmem>>, vector<2x4xf32>
    %cst_33 = arith.constant dense<0.000000e+00> : vector<2x1xf32>
    %59 = tpu.matmul %58, %57, %cst_33 {dimension_numbers = #tpu.dot_dimension_numbers<[1], [0], [0], [1], [0, 0, 1, 1], [], []>} : vector<2x4xf32>, vector<4x1xf32>, vector<2x1xf32> -> vector<2x1xf32>
    %c0_34 = arith.constant 0 : index
    %c0_35 = arith.constant 0 : index
    %60 = vector.load %arg6[%c0_34, %c0_35] : memref<2x1xf32, #tpu.memory_space<vmem>>, vector<2x1xf32>
    %61 = arith.addf %59, %60 : vector<2x1xf32>
    %cst_36 = arith.constant 0.000000e+00 : f32
    %62 = vector.broadcast %cst_36 : f32 to vector<2x1xf32>
    %63 = arith.cmpf ogt, %61, %62 : vector<2x1xf32>
    %cst_37 = arith.constant 0.00999999977 : f32
    %64 = vector.broadcast %cst_37 : f32 to vector<2x1xf32>
    %65 = arith.mulf %64, %61 : vector<2x1xf32>
    %66 = arith.select %63, %61, %65 : vector<2x1xi1>, vector<2x1xf32>
    %c0_38 = arith.constant 0 : index
    %c0_39 = arith.constant 0 : index
    %67 = vector.load %arg7[%c0_38, %c0_39] : memref<4x2xf32, #tpu.memory_space<vmem>>, vector<4x2xf32>
    %cst_40 = arith.constant dense<0.000000e+00> : vector<4x1xf32>
    %68 = tpu.matmul %67, %66, %cst_40 {dimension_numbers = #tpu.dot_dimension_numbers<[1], [0], [0], [1], [0, 0, 1, 1], [], []>} : vector<4x2xf32>, vector<2x1xf32>, vector<4x1xf32> -> vector<4x1xf32>
    %c0_41 = arith.constant 0 : index
    %c0_42 = arith.constant 0 : index
    %69 = vector.load %arg8[%c0_41, %c0_42] : memref<4x1xf32, #tpu.memory_space<vmem>>, vector<4x1xf32>
    %70 = arith.addf %68, %69 : vector<4x1xf32>
    %71 = arith.negf %70 : vector<4x1xf32>
    %72 = math.exp %71 : vector<4x1xf32>
    %cst_43 = arith.constant 1.000000e+00 : f32
    %73 = vector.broadcast %cst_43 : f32 to vector<4x1xf32>
    %74 = arith.addf %73, %72 : vector<4x1xf32>
    %75 = arith.divf %73, %74 : vector<4x1xf32>
    %76 = vector.broadcast %75 : vector<4x1xf32> to vector<4x256xf32>
    %77 = arith.addf %76, %53 : vector<4x256xf32>
    %78 = arith.mulf %1, %77 : vector<4x256xf32>
    %cst_44 = arith.constant dense<0xFF800000> : vector<256xf32>
    %79 = vector.multi_reduction <maximumf>, %78, %cst_44 [0] : vector<4x256xf32> to vector<256xf32>
    %80 = vector.shape_cast %79 : vector<256xf32> to vector<1x256xf32>
    %c0_45 = arith.constant 0 : index
    %c0_46 = arith.constant 0 : index
    %c0_47 = arith.constant 0 : index
    %81 = vector.load %arg10[%c0_45, %c0_46, %c0_47] : memref<1x4x256xf32, #tpu.memory_space<vmem>>, vector<1x4x256xf32>
    %82 = vector.shape_cast %81 : vector<1x4x256xf32> to vector<4x256xf32>
    %83 = vector.shape_cast %78 : vector<4x256xf32> to vector<1x4x256xf32>
    tpu.vector_store %arg10[%c0_45, %c0_46, %c0_47], %83 {strides = array<i32>} : memref<1x4x256xf32, #tpu.memory_space<vmem>>, vector<1x4x256xf32>,
    %84 = vector.broadcast %80 : vector<1x256xf32> to vector<4x256xf32>
    %85 = arith.cmpf oeq, %78, %84 : vector<4x256xf32>
    %86 = arith.extui %85 : vector<4x256xi1> to vector<4x256xi32>
    %87 = arith.sitofp %86 : vector<4x256xi32> to vector<4x256xf32>
    %c0_48 = arith.constant 0 : index
    %c0_49 = arith.constant 0 : index
    %c0_50 = arith.constant 0 : index
    %88 = vector.load %arg9[%c0_48, %c0_49, %c0_50] : memref<1x4x256xf32, #tpu.memory_space<vmem>>, vector<1x4x256xf32>
    %89 = vector.shape_cast %88 : vector<1x4x256xf32> to vector<4x256xf32>
    %90 = vector.shape_cast %87 : vector<4x256xf32> to vector<1x4x256xf32>
    tpu.vector_store %arg9[%c0_48, %c0_49, %c0_50], %90 {strides = array<i32>} : memref<1x4x256xf32, #tpu.memory_space<vmem>>, vector<1x4x256xf32>,
    return
  }
  func.func @transform_0(%arg0: i32) -> (i32, i32, i32) {
    %c0_i32 = arith.constant 0 : i32
    %c0_i32_0 = arith.constant 0 : i32
    %c0_i32_1 = arith.constant 0 : i32
    return %arg0, %c0_i32, %c0_i32_0 : i32, i32, i32
  }
  func.func @transform_1(%arg0: i32) -> (i32, i32) {
    %c0_i32 = arith.constant 0 : i32
    %c0_i32_0 = arith.constant 0 : i32
    %c0_i32_1 = arith.constant 0 : i32
    return %c0_i32, %c0_i32_0 : i32, i32
  }
  func.func @transform_2(%arg0: i32) -> (i32, i32) {
    %c0_i32 = arith.constant 0 : i32
    %c0_i32_0 = arith.constant 0 : i32
    %c0_i32_1 = arith.constant 0 : i32
    return %c0_i32, %c0_i32_0 : i32, i32
  }
  func.func @transform_3(%arg0: i32) -> (i32, i32) {
    %c0_i32 = arith.constant 0 : i32
    %c0_i32_0 = arith.constant 0 : i32
    %c0_i32_1 = arith.constant 0 : i32
    return %c0_i32, %c0_i32_0 : i32, i32
  }
  func.func @transform_4(%arg0: i32) -> (i32, i32) {
    %c0_i32 = arith.constant 0 : i32
    %c0_i32_0 = arith.constant 0 : i32
    %c0_i32_1 = arith.constant 0 : i32
    return %c0_i32, %c0_i32_0 : i32, i32
  }
  func.func @transform_5(%arg0: i32) -> (i32, i32) {
    %c0_i32 = arith.constant 0 : i32
    %c0_i32_0 = arith.constant 0 : i32
    %c0_i32_1 = arith.constant 0 : i32
    return %c0_i32, %c0_i32_0 : i32, i32
  }
  func.func @transform_6(%arg0: i32) -> (i32, i32) {
    %c0_i32 = arith.constant 0 : i32
    %c0_i32_0 = arith.constant 0 : i32
    %c0_i32_1 = arith.constant 0 : i32
    return %c0_i32, %c0_i32_0 : i32, i32
  }
  func.func @transform_7(%arg0: i32) -> (i32, i32) {
    %c0_i32 = arith.constant 0 : i32
    %c0_i32_0 = arith.constant 0 : i32
    %c0_i32_1 = arith.constant 0 : i32
    return %c0_i32, %c0_i32_0 : i32, i32
  }
  func.func @transform_8(%arg0: i32) -> (i32, i32, i32) {
    %c0_i32 = arith.constant 0 : i32
    %c0_i32_0 = arith.constant 0 : i32
    %c0_i32_1 = arith.constant 0 : i32
    return %arg0, %c0_i32, %c0_i32_0 : i32, i32, i32
  }
  func.func @transform_9(%arg0: i32) -> (i32, i32, i32) {
    %c0_i32 = arith.constant 0 : i32
    %c0_i32_0 = arith.constant 0 : i32
    %c0_i32_1 = arith.constant 0 : i32
    return %arg0, %c0_i32, %c0_i32_0 : i32, i32, i32
  }
}

</mosaic_0001>

<llo_original>
// kernel: scse_mask_forward.1
$region0: #{scse_mask_forward.1}
  #allocation0 [shape = 'u32[]', space=smem, size = 0x4, offset = 0x4, fixed_abs, tag = 'smem constant byte address 0x4 - core index']
  #allocation1 [shape = 'u32[144,128]{1,0:T(1,128)}', space=vmem, size = 0x12000, scoped, tag = 'internal scratch']
  #allocation2 [shape = 'f32[36,256]{1,0:T(8,128)}', space=vmem, size = 0xa000, scoped, tag = 'scratch operand']
  %s0 = inlined_call_operand.vmem [shape: f32[2,4,256], index: 0, kind: input, shape index: {}]
  %s1 = inlined_call_operand.vmem [shape: f32[9,256], index: 1, kind: input, shape index: {}]
  %s2 = inlined_call_operand.vmem [shape: f32[4,36], index: 2, kind: input, shape index: {}]
  %s3 = inlined_call_operand.vmem [shape: f32[4,1], index: 3, kind: input, shape index: {}]
  %s4 = inlined_call_operand.vmem [shape: f32[2,4], index: 4, kind: input, shape index: {}]
  %s5 = inlined_call_operand.vmem [shape: f32[2,1], index: 5, kind: input, shape index: {}]
  %s6 = inlined_call_operand.vmem [shape: f32[4,2], index: 6, kind: input, shape index: {}]
  %s7 = inlined_call_operand.vmem [shape: f32[4,1], index: 7, kind: input, shape index: {}]
  %s8 = inlined_call_operand.vmem [shape: f32[2,4,256], index: 8, kind: output, shape index: {0}]
  %s9 = inlined_call_operand.vmem [shape: f32[2,4,256], index: 9, kind: output, shape index: {1}]
  %10 = xla_tuple %s8, %s9
  %s11 = sld [smem:[#allocation0]]
  $region73: #{scse_mask_forward.1} parent=0
    _
  %s13 = ssub.s32 1, %s11
  %s14 = scalar_select 0, %s13, %s11
  loop: start=0, step=1, limit=4
  $region2: #{scse_mask_forward.1} parent=0 // loop_pre_header
    _
  $region3: #{scse_mask_forward.1} parent=0 // loop_header
    %s16 = sphi 0, %s20
    %p17 = scmp.ge.s32.totalorder %s16, 4
    %s26 = sphi 0, %s28
    %s29 = sphi 0, %s26
    %s30 = sphi 0, %s29
    %s46 = sphi 0, %s30
    %s50 = sphi 0, %s50
    %s52 = sphi 0, %s50
    %s53 = sphi 0, %s52
    %s67 = sphi 0, %s53
    %s71 = sphi 0, %s71
    %s73 = sphi 0, %s71
    %s74 = sphi 0, %s73
    %s88 = sphi 0, %s74
    %s92 = sphi 0, %s92
    %s94 = sphi 0, %s92
    %s95 = sphi 0, %s94
    %s109 = sphi 0, %s95
    %s113 = sphi 0, %s113
    %s115 = sphi 0, %s113
    %s116 = sphi 0, %s115
    %s130 = sphi 0, %s116
    %s134 = sphi 0, %s134
    %s136 = sphi 0, %s134
    %s137 = sphi 0, %s136
    %s151 = sphi 0, %s137
    %s155 = sphi 0, %s155
    %s157 = sphi 0, %s155
    %s158 = sphi 0, %s157
    %s172 = sphi 0, %s158
    %s176 = sphi 0, %s176
    %s178 = sphi 0, %s176
    %s179 = sphi 0, %s178
    %s193 = sphi 0, %s179
    %s199 = sphi 0, %s201
    %s202 = sphi 0, %s199
    %s203 = sphi 0, %s202
    %s219 = sphi 0, %s203
    %s225 = sphi 0, %s227
    %s228 = sphi 0, %s225
    %s229 = sphi 0, %s228
    %s245 = sphi 0, %s229
  $region4: #{scse_mask_forward.1} parent=0 // loop_header_branch
    %19 = sbr.rel (%p17) target = $region8
  $region5: #{scse_mask_forward.1} parent=0 // loop_body
    %s21 = ssub.s32 %s16, 1
    %s22 = ssub.s32 %s16, 2
    %s23 = sadd.s32 %s16, 1
    %s24 = ssub.s32 %s16, %s23
    %p25 = scmp.eq.s32.totalorder %s24, 0
    %s27 = sadd.s32 %s26, 1
    %s28 = scalar_select %p25, %s26, %s27
    %p31 = pneg %p25
    %p32 = scmp.eq.s32.totalorder %s16, 1
    %p33 = por %p31, %p32
    %p34 = scmp.ne.s32.totalorder %s26, %s29
    %p35 = scmp.eq.s32.totalorder %s16, 0
    %p36 = por %p34, %p35
    %p37 = scmp.ne.s32.totalorder %s26, %s29
    %p38 = scmp.eq.s32.totalorder %s21, 1
    %p39 = por %p37, %p38
    %p40 = scmp.ne.s32.totalorder %s29, %s30
    %p41 = scmp.eq.s32.totalorder %s21, 0
    %p42 = por %p40, %p41
    %p43 = scmp.ne.s32.totalorder %s29, %s30
    %p44 = scmp.eq.s32.totalorder %s22, 1
    %p45 = por %p43, %p44
    %p47 = scmp.ne.s32.totalorder %s30, %s46
    %p48 = scmp.eq.s32.totalorder %s22, 0
    %p49 = por %p47, %p48
    %s51 = sadd.s32 %s50, 1
    %p54 = scmp.eq.s32.totalorder %s16, 1
    %p55 = scmp.ne.s32.totalorder %s50, %s52
    %p56 = scmp.eq.s32.totalorder %s16, 0
    %p57 = por %p55, %p56
    %p58 = scmp.ne.s32.totalorder %s50, %s52
    %p59 = scmp.eq.s32.totalorder %s21, 1
    %p60 = por %p58, %p59
    %p61 = scmp.ne.s32.totalorder %s52, %s53
    %p62 = scmp.eq.s32.totalorder %s21, 0
    %p63 = por %p61, %p62
    %p64 = scmp.ne.s32.totalorder %s52, %s53
    %p65 = scmp.eq.s32.totalorder %s22, 1
    %p66 = por %p64, %p65
    %p68 = scmp.ne.s32.totalorder %s53, %s67
    %p69 = scmp.eq.s32.totalorder %s22, 0
    %p70 = por %p68, %p69
    %s72 = sadd.s32 %s71, 1
    %p75 = scmp.eq.s32.totalorder %s16, 1
    %p76 = scmp.ne.s32.totalorder %s71, %s73
    %p77 = scmp.eq.s32.totalorder %s16, 0
    %p78 = por %p76, %p77
    %p79 = scmp.ne.s32.totalorder %s71, %s73
    %p80 = scmp.eq.s32.totalorder %s21, 1
    %p81 = por %p79, %p80
    %p82 = scmp.ne.s32.totalorder %s73, %s74
    %p83 = scmp.eq.s32.totalorder %s21, 0
    %p84 = por %p82, %p83
    %p85 = scmp.ne.s32.totalorder %s73, %s74
    %p86 = scmp.eq.s32.totalorder %s22, 1
    %p87 = por %p85, %p86
    %p89 = scmp.ne.s32.totalorder %s74, %s88
    %p90 = scmp.eq.s32.totalorder %s22, 0
    %p91 = por %p89, %p90
    %s93 = sadd.s32 %s92, 1
    %p96 = scmp.eq.s32.totalorder %s16, 1
    %p97 = scmp.ne.s32.totalorder %s92, %s94
    %p98 = scmp.eq.s32.totalorder %s16, 0
    %p99 = por %p97, %p98
    %p100 = scmp.ne.s32.totalorder %s92, %s94
    %p101 = scmp.eq.s32.totalorder %s21, 1
    %p102 = por %p100, %p101
    %p103 = scmp.ne.s32.totalorder %s94, %s95
    %p104 = scmp.eq.s32.totalorder %s21, 0
    %p105 = por %p103, %p104
    %p106 = scmp.ne.s32.totalorder %s94, %s95
    %p107 = scmp.eq.s32.totalorder %s22, 1
    %p108 = por %p106, %p107
    %p110 = scmp.ne.s32.totalorder %s95, %s109
    %p111 = scmp.eq.s32.totalorder %s22, 0
    %p112 = por %p110, %p111
    %s114 = sadd.s32 %s113, 1
    %p117 = scmp.eq.s32.totalorder %s16, 1
    %p118 = scmp.ne.s32.totalorder %s113, %s115
    %p119 = scmp.eq.s32.totalorder %s16, 0
    %p120 = por %p118, %p119
    %p121 = scmp.ne.s32.totalorder %s113, %s115
    %p122 = scmp.eq.s32.totalorder %s21, 1
    %p123 = por %p121, %p122
    %p124 = scmp.ne.s32.totalorder %s115, %s116
    %p125 = scmp.eq.s32.totalorder %s21, 0
    %p126 = por %p124, %p125
    %p127 = scmp.ne.s32.totalorder %s115, %s116
    %p128 = scmp.eq.s32.totalorder %s22, 1
    %p129 = por %p127, %p128
    %p131 = scmp.ne.s32.totalorder %s116, %s130
    %p132 = scmp.eq.s32.totalorder %s22, 0
    %p133 = por %p131, %p132
    %s135 = sadd.s32 %s134, 1
    %p138 = scmp.eq.s32.totalorder %s16, 1
    %p139 = scmp.ne.s32.totalorder %s134, %s136
    %p140 = scmp.eq.s32.totalorder %s16, 0
    %p141 = por %p139, %p140
    %p142 = scmp.ne.s32.totalorder %s134, %s136
    %p143 = scmp.eq.s32.totalorder %s21, 1
    %p144 = por %p142, %p143
    %p145 = scmp.ne.s32.totalorder %s136, %s137
    %p146 = scmp.eq.s32.totalorder %s21, 0
    %p147 = por %p145, %p146
    %p148 = scmp.ne.s32.totalorder %s136, %s137
    %p149 = scmp.eq.s32.totalorder %s22, 1
    %p150 = por %p148, %p149
    %p152 = scmp.ne.s32.totalorder %s137, %s151
    %p153 = scmp.eq.s32.totalorder %s22, 0
    %p154 = por %p152, %p153
    %s156 = sadd.s32 %s155, 1
    %p159 = scmp.eq.s32.totalorder %s16, 1
    %p160 = scmp.ne.s32.totalorder %s155, %s157
    %p161 = scmp.eq.s32.totalorder %s16, 0
    %p162 = por %p160, %p161
    %p163 = scmp.ne.s32.totalorder %s155, %s157
    %p164 = scmp.eq.s32.totalorder %s21, 1
    %p165 = por %p163, %p164
    %p166 = scmp.ne.s32.totalorder %s157, %s158
    %p167 = scmp.eq.s32.totalorder %s21, 0
    %p168 = por %p166, %p167
    %p169 = scmp.ne.s32.totalorder %s157, %s158
    %p170 = scmp.eq.s32.totalorder %s22, 1
    %p171 = por %p169, %p170
    %p173 = scmp.ne.s32.totalorder %s158, %s172
    %p174 = scmp.eq.s32.totalorder %s22, 0
    %p175 = por %p173, %p174
    %s177 = sadd.s32 %s176, 1
    %p180 = scmp.eq.s32.totalorder %s16, 1
    %p181 = scmp.ne.s32.totalorder %s176, %s178
    %p182 = scmp.eq.s32.totalorder %s16, 0
    %p183 = por %p181, %p182
    %p184 = scmp.ne.s32.totalorder %s176, %s178
    %p185 = scmp.eq.s32.totalorder %s21, 1
    %p186 = por %p184, %p185
    %p187 = scmp.ne.s32.totalorder %s178, %s179
    %p188 = scmp.eq.s32.totalorder %s21, 0
    %p189 = por %p187, %p188
    %p190 = scmp.ne.s32.totalorder %s178, %s179
    %p191 = scmp.eq.s32.totalorder %s22, 1
    %p192 = por %p190, %p191
    %p194 = scmp.ne.s32.totalorder %s179, %s193
    %p195 = scmp.eq.s32.totalorder %s22, 0
    %p196 = por %p194, %p195
    %s197 = ssub.s32 %s16, %s23
    %p198 = scmp.eq.s32.totalorder %s197, 0
    %s200 = sadd.s32 %s199, 1
    %s201 = scalar_select %p198, %s199, %s200
    %p204 = pneg %p198
    %p205 = scmp.eq.s32.totalorder %s16, 1
    %p206 = por %p204, %p205
    %p207 = scmp.ne.s32.totalorder %s199, %s202
    %p208 = scmp.eq.s32.totalorder %s16, 0
    %p209 = por %p207, %p208
    %p210 = scmp.ne.s32.totalorder %s199, %s202
    %p211 = scmp.eq.s32.totalorder %s21, 1
    %p212 = por %p210, %p211
    %p213 = scmp.ne.s32.totalorder %s202, %s203
    %p214 = scmp.eq.s32.totalorder %s21, 0
    %p215 = por %p213, %p214
    %p216 = scmp.ne.s32.totalorder %s202, %s203
    %p217 = scmp.eq.s32.totalorder %s22, 1
    %p218 = por %p216, %p217
    %p220 = scmp.ne.s32.totalorder %s203, %s219
    %p221 = scmp.eq.s32.totalorder %s22, 0
    %p222 = por %p220, %p221
    %s223 = ssub.s32 %s16, %s23
    %p224 = scmp.eq.s32.totalorder %s223, 0
    %s226 = sadd.s32 %s225, 1
    %s227 = scalar_select %p224, %s225, %s226
    %p230 = pneg %p224
    %p231 = scmp.eq.s32.totalorder %s16, 1
    %p232 = por %p230, %p231
    %p233 = scmp.ne.s32.totalorder %s225, %s228
    %p234 = scmp.eq.s32.totalorder %s16, 0
    %p235 = por %p233, %p234
    %p236 = scmp.ne.s32.totalorder %s225, %s228
    %p237 = scmp.eq.s32.totalorder %s21, 1
    %p238 = por %p236, %p237
    %p239 = scmp.ne.s32.totalorder %s228, %s229
    %p240 = scmp.eq.s32.totalorder %s21, 0
    %p241 = por %p239, %p240
    %p242 = scmp.ne.s32.totalorder %s228, %s229
    %p243 = scmp.eq.s32.totalorder %s22, 1
    %p244 = por %p242, %p243
    %p246 = scmp.ne.s32.totalorder %s229, %s245
    %p247 = scmp.eq.s32.totalorder %s22, 0
    %p248 = por %p246, %p247
    %p249 = scmp.le.s32.totalorder 1, %s16
    %p250 = scmp.lt.s32.totalorder %s16, 3
    %p251 = pnand %p249, %p250
    %p252 = pneg %p251
    // Predicated region
    $region9: #{scse_mask_forward.1} parent=5 // pred_check
      _
    $region10: #{scse_mask_forward.1} parent=5 // pred_check_branch
      %254 = sbr.rel (%p251) target = $region12
    $region11: #{scse_mask_forward.1} parent=5 // pred_region
      %s255 = ssub.s32 %s16, 1
      // Predicated region
      $region13: #{scse_mask_forward.1} parent=11 // pred_check
        %p256 = pneg %p63
      $region14: #{scse_mask_forward.1} parent=11 // pred_check_branch
        %258 = sbr.rel (%p256) target = $region16
      $region15: #{scse_mask_forward.1} parent=11 // pred_region
        _
      $region16: #{scse_mask_forward.1} parent=11 // pred_fallthru
        _
      // Predicated region
      $region17: #{scse_mask_forward.1} parent=11 // pred_check
        %p259 = pneg %p84
      $region18: #{scse_mask_forward.1} parent=11 // pred_check_branch
        %261 = sbr.rel (%p259) target = $region20
      $region19: #{scse_mask_forward.1} parent=11 // pred_region
        _
      $region20: #{scse_mask_forward.1} parent=11 // pred_fallthru
        _
      // Predicated region
      $region21: #{scse_mask_forward.1} parent=11 // pred_check
        %p262 = pneg %p105
      $region22: #{scse_mask_forward.1} parent=11 // pred_check_branch
        %264 = sbr.rel (%p262) target = $region24
      $region23: #{scse_mask_forward.1} parent=11 // pred_region
        _
      $region24: #{scse_mask_forward.1} parent=11 // pred_fallthru
        _
      // Predicated region
      $region25: #{scse_mask_forward.1} parent=11 // pred_check
        %p265 = pneg %p126
      $region26: #{scse_mask_forward.1} parent=11 // pred_check_branch
        %267 = sbr.rel (%p265) target = $region28
      $region27: #{scse_mask_forward.1} parent=11 // pred_region
        _
      $region28: #{scse_mask_forward.1} parent=11 // pred_fallthru
        _
      // Predicated region
      $region29: #{scse_mask_forward.1} parent=11 // pred_check
        %p268 = pneg %p147
      $region30: #{scse_mask_forward.1} parent=11 // pred_check_branch
        %270 = sbr.rel (%p268) target = $region32
      $region31: #{scse_mask_forward.1} parent=11 // pred_region
        _
      $region32: #{scse_mask_forward.1} parent=11 // pred_fallthru
        _
      // Predicated region
      $region33: #{scse_mask_forward.1} parent=11 // pred_check
        %p271 = pneg %p168
      $region34: #{scse_mask_forward.1} parent=11 // pred_check_branch
        %273 = sbr.rel (%p271) target = $region36
      $region35: #{scse_mask_forward.1} parent=11 // pred_region
        _
      $region36: #{scse_mask_forward.1} parent=11 // pred_fallthru
        _
      // Predicated region
      $region37: #{scse_mask_forward.1} parent=11 // pred_check
        %p274 = pneg %p189
      $region38: #{scse_mask_forward.1} parent=11 // pred_check_branch
        %276 = sbr.rel (%p274) target = $region40
      $region39: #{scse_mask_forward.1} parent=11 // pred_region
        _
      $region40: #{scse_mask_forward.1} parent=11 // pred_fallthru
        _
    $region12: #{scse_mask_forward.1} parent=5 // pred_fallthru
      _
    %p277 = scmp.lt.s32.totalorder %s16, 2
    // Predicated region
    $region41: #{scse_mask_forward.1} parent=5 // pred_check
      %p278 = pneg %p277
    $region42: #{scse_mask_forward.1} parent=5 // pred_check_branch
      %280 = sbr.rel (%p278) target = $region44
    $region43: #{scse_mask_forward.1} parent=5 // pred_region
      // Predicated region
      $region45: #{scse_mask_forward.1} parent=43 // pred_check
        %p281 = pneg %p36
      $region46: #{scse_mask_forward.1} parent=43 // pred_check_branch
        %283 = sbr.rel (%p281) target = $region48
      $region47: #{scse_mask_forward.1} parent=43 // pred_region
        %p284 = scmp.lt.s32.totalorder %s16, 1
        %s285 = scalar_select %p284, %s16, 1
        %s286 = smul.addr %s285, 2
        %s287 = smul.addr %s286, 4
        %s288 = scalar_lea.vmem %s0, %s287
      $region48: #{scse_mask_forward.1} parent=43 // pred_fallthru
        _
    $region44: #{scse_mask_forward.1} parent=5 // pred_fallthru
      _
    %p289 = scmp.le.s32.totalorder 1, %s16
    %p290 = scmp.lt.s32.totalorder %s16, 3
    %p291 = pnand %p289, %p290
    %p292 = pneg %p291
    // Predicated region
    $region49: #{scse_mask_forward.1} parent=5 // pred_check
      _
    $region50: #{scse_mask_forward.1} parent=5 // pred_check_branch
      %294 = sbr.rel (%p291) target = $region52
    $region51: #{scse_mask_forward.1} parent=5 // pred_region
      %s295 = ssub.s32 %s16, 1
      %p296 = scmp.lt.s32.totalorder %s21, 1
      %s297 = scalar_select %p296, %s21, 1
      %s298 = smul.addr %s297, 2
      %s299 = smul.addr %s298, 4
      %s300 = scalar_lea.vmem %s0, %s299
      %p301 = pneg %p42
      %p302 = pneg %p39
      %p303 = pneg %p63
      %p304 = pneg %p60
      %p305 = pneg %p84
      %p306 = pneg %p81
      %p307 = pneg %p105
      %p308 = pneg %p102
      %p309 = pneg %p126
      %p310 = pneg %p123
      %p311 = pneg %p147
      %p312 = pneg %p144
      %p313 = pneg %p168
      %p314 = pneg %p165
      %p315 = pneg %p189
      %p316 = pneg %p186
      %p317 = pneg %p215
      %p318 = pneg %p212
      %p319 = scmp.lt.s32.totalorder %s21, 1
      %s320 = scalar_select %p319, %s21, 1
      %s321 = smul.addr %s320, 2
      %s322 = smul.addr %s321, 4
      %s323 = scalar_lea.vmem %s8, %s322
      %p324 = pneg %p241
      %p325 = pneg %p238
      %p326 = scmp.lt.s32.totalorder %s21, 1
      %s327 = scalar_select %p326, %s21, 1
      %s328 = smul.addr %s327, 2
      %s329 = smul.addr %s328, 4
      %s330 = scalar_lea.vmem %s9, %s329
      %p331 = scmp.lt.s32.totalorder %s21, 1
      %s332 = scalar_select %p331, %s21, 1
      %s333 = smul.addr %s332, 2
      %s334 = smul.addr %s333, 4
      %s335 = scalar_lea.vmem %s0, %s334
      %p336 = scmp.lt.s32.totalorder %s21, 1
      %s337 = scalar_select %p336, %s21, 1
      %s338 = smul.addr %s337, 2
      %s339 = smul.addr %s338, 4
      %s340 = scalar_lea.vmem %s8, %s339
      %p341 = scmp.lt.s32.totalorder %s21, 1
      %s342 = scalar_select %p341, %s21, 1
      %s343 = smul.addr %s342, 2
      %s344 = smul.addr %s343, 4
      %s345 = scalar_lea.vmem %s9, %s344
      %v346 = vld [vmem:[%s335] sm:$0xff]
      %v348 = vcombine.high %v346, %v346
      %350 = vrot.lane.b32.xlu0 %v346, 17
      %v351 = vpop.permute.xlu0 %350
      %352 = vrot.lane.b32.xlu0 %v348, 17
      %v353 = vpop.permute.xlu0 %352
      %v354 = vlaneseq
      %v355 = vand.u32 %v354, 127
      %vm356 = vcmp.lt.s32.totalorder %v355, 17
      %v357 = vsel %vm356, %v351, %v353
      %v358 = vsel %vm356, %v353, %v351
      %v359 = vld [vmem:[%s1] ss:$8 sm:$0x3]
      %v361 = vlaneseq
      %v362 = vshrl.u32 %v361, 7
      %v363 = vsub.s32 0, %v362
      %v364 = vrot.slane %v359, %v363
      %v365 = vlaneseq
      %v366 = vshrl.u32 %v365, 7
      %v367 = vsub.s32 1, %v366
      %v368 = vrot.slane %v359, %v367
      %v371 = vmul.f32 %v358, %v364
      %v372 = vmul.f32 %v357, %v368
      %373 = vst [vmem:[#allocation2] sm:$0xf] %v371
      %374 = vst [vmem:[#allocation2 + $0x8] sm:$0xf] %v372
      %375 = vrot.lane.b32.xlu0 %v346, 16
      %v376 = vpop.permute.xlu0 %375
      %377 = vrot.lane.b32.xlu0 %v348, 16
      %v378 = vpop.permute.xlu0 %377
      %vm379 = vcmp.lt.s32.totalorder %v355, 16
      %v380 = vsel %vm379, %v376, %v378
      %v381 = vsel %vm379, %v378, %v376
      %s382 = scalar_lea.vmem %s1, 1
      %v383 = vld [vmem:[%s382] ss:$8 sm:$0x3]
      %v385 = vlaneseq
      %v386 = vshrl.u32 %v385, 7
      %v387 = vsub.s32 0, %v386
      %v388 = vrot.slane %v383, %v387
      %v389 = vlaneseq
      %v390 = vshrl.u32 %v389, 7
      %v391 = vsub.s32 1, %v390
      %v392 = vrot.slane %v383, %v391
      %v395 = vmul.f32 %v381, %v388
      %v396 = vmul.f32 %v380, %v392
      %v399 = vrot.slane %v395, 4
      %v400 = vrot.slane %v396, 4
      %403 = vst [vmem:[#allocation2] sm:$0xf0] %v399
      %404 = vst [vmem:[#allocation2 + $0x8] sm:$0xf0] %v400
      %405 = vrot.lane.b32.xlu0 %v346, 15
      %v406 = vpop.permute.xlu0 %405
      %407 = vrot.lane.b32.xlu0 %v348, 15
      %v408 = vpop.permute.xlu0 %407
      %vm409 = vcmp.lt.s32.totalorder %v355, 15
      %v410 = vsel %vm409, %v406, %v408
      %v411 = vsel %vm409, %v408, %v406
      %s412 = scalar_lea.vmem %s1, 2
      %v413 = vld [vmem:[%s412] ss:$8 sm:$0x3]
      %v415 = vlaneseq
      %v416 = vshrl.u32 %v415, 7
      %v417 = vsub.s32 0, %v416
      %v418 = vrot.slane %v413, %v417
      %v419 = vlaneseq
      %v420 = vshrl.u32 %v419, 7
      %v421 = vsub.s32 1, %v420
      %v422 = vrot.slane %v413, %v421
      %v425 = vmul.f32 %v411, %v418
      %v426 = vmul.f32 %v410, %v422
      %427 = vst [vmem:[#allocation2 + $0x10] sm:$0xf] %v425
      %428 = vst [vmem:[#allocation2 + $0x18] sm:$0xf] %v426
      %429 = vrot.lane.b32.xlu0 %v346, 1
      %v430 = vpop.permute.xlu0 %429
      %431 = vrot.lane.b32.xlu0 %v348, 1
      %v432 = vpop.permute.xlu0 %431
      %vm433 = vcmp.lt.s32.totalorder %v355, 1
      %v434 = vsel %vm433, %v430, %v432
      %v435 = vsel %vm433, %v432, %v430
      %s436 = scalar_lea.vmem %s1, 3
      %v437 = vld [vmem:[%s436] ss:$8 sm:$0x3]
      %v439 = vlaneseq
      %v440 = vshrl.u32 %v439, 7
      %v441 = vsub.s32 0, %v440
      %v442 = vrot.slane %v437, %v441
      %v443 = vlaneseq
      %v444 = vshrl.u32 %v443, 7
      %v445 = vsub.s32 1, %v444
      %v446 = vrot.slane %v437, %v445
      %v449 = vmul.f32 %v435, %v442
      %v450 = vmul.f32 %v434, %v446
      %v453 = vrot.slane %v449, 4
      %v454 = vrot.slane %v450, 4
      %457 = vst [vmem:[#allocation2 + $0x10] sm:$0xf0] %v453
      %458 = vst [vmem:[#allocation2 + $0x18] sm:$0xf0] %v454
      %459 = vst [vmem:[#allocation2 + $0x20] sm:$0xf] %v346
      %460 = vst [vmem:[#allocation2 + $0x28] sm:$0xf] %v348
      %461 = vrot.lane.b32.xlu0 %v346, 127
      %v462 = vpop.permute.xlu0 %461
      %463 = vrot.lane.b32.xlu0 %v348, 127
      %v464 = vpop.permute.xlu0 %463
      %vm465 = vcmp.lt.s32.totalorder %v355, 127
      %v466 = vsel %vm465, %v462, %v464
      %v467 = vsel %vm465, %v464, %v462
      %s468 = scalar_lea.vmem %s1, 5
      %v469 = vld [vmem:[%s468] ss:$8 sm:$0x3]
      %v471 = vlaneseq
      %v472 = vshrl.u32 %v471, 7
      %v473 = vsub.s32 0, %v472
      %v474 = vrot.slane %v469, %v473
      %v475 = vlaneseq
      %v476 = vshrl.u32 %v475, 7
      %v477 = vsub.s32 1, %v476
      %v478 = vrot.slane %v469, %v477
      %v481 = vmul.f32 %v466, %v474
      %v482 = vmul.f32 %v467, %v478
      %v485 = vrot.slane %v481, 4
      %v486 = vrot.slane %v482, 4
      %489 = vst [vmem:[#allocation2 + $0x20] sm:$0xf0] %v485
      %490 = vst [vmem:[#allocation2 + $0x28] sm:$0xf0] %v486
      %491 = vrot.lane.b32.xlu0 %v346, 113
      %v492 = vpop.permute.xlu0 %491
      %493 = vrot.lane.b32.xlu0 %v348, 113
      %v494 = vpop.permute.xlu0 %493
      %vm495 = vcmp.lt.s32.totalorder %v355, 113
      %v496 = vsel %vm495, %v492, %v494
      %v497 = vsel %vm495, %v494, %v492
      %s498 = scalar_lea.vmem %s1, 6
      %v499 = vld [vmem:[%s498] ss:$8 sm:$0x3]
      %v501 = vlaneseq
      %v502 = vshrl.u32 %v501, 7
      %v503 = vsub.s32 0, %v502
      %v504 = vrot.slane %v499, %v503
      %v505 = vlaneseq
      %v506 = vshrl.u32 %v505, 7
      %v507 = vsub.s32 1, %v506
      %v508 = vrot.slane %v499, %v507
      %v511 = vmul.f32 %v496, %v504
      %v512 = vmul.f32 %v497, %v508
      %513 = vst [vmem:[#allocation2 + $0x30] sm:$0xf] %v511
      %514 = vst [vmem:[#allocation2 + $0x38] sm:$0xf] %v512
      %515 = vrot.lane.b32.xlu0 %v346, 112
      %v516 = vpop.permute.xlu0 %515
      %517 = vrot.lane.b32.xlu0 %v348, 112
      %v518 = vpop.permute.xlu0 %517
      %vm519 = vcmp.lt.s32.totalorder %v355, 112
      %v520 = vsel %vm519, %v516, %v518
      %v521 = vsel %vm519, %v518, %v516
      %s522 = scalar_lea.vmem %s1, 7
      %v523 = vld [vmem:[%s522] ss:$8 sm:$0x3]
      %v525 = vlaneseq
      %v526 = vshrl.u32 %v525, 7
      %v527 = vsub.s32 0, %v526
      %v528 = vrot.slane %v523, %v527
      %v529 = vlaneseq
      %v530 = vshrl.u32 %v529, 7
      %v531 = vsub.s32 1, %v530
      %v532 = vrot.slane %v523, %v531
      %v535 = vmul.f32 %v520, %v528
      %v536 = vmul.f32 %v521, %v532
      %v539 = vrot.slane %v535, 4
      %v540 = vrot.slane %v536, 4
      %543 = vst [vmem:[#allocation2 + $0x30] sm:$0xf0] %v539
      %544 = vst [vmem:[#allocation2 + $0x38] sm:$0xf0] %v540
      %545 = vrot.lane.b32.xlu0 %v346, 111
      %v546 = vpop.permute.xlu0 %545
      %547 = vrot.lane.b32.xlu0 %v348, 111
      %v548 = vpop.permute.xlu0 %547
      %vm549 = vcmp.lt.s32.totalorder %v355, 111
      %v550 = vsel %vm549, %v546, %v548
      %v551 = vsel %vm549, %v548, %v546
      %s552 = scalar_lea.vmem %s1, 16
      %v553 = vld [vmem:[%s552] ss:$8 sm:$0x3]
      %v555 = vlaneseq
      %v556 = vshrl.u32 %v555, 7
      %v557 = vsub.s32 0, %v556
      %v558 = vrot.slane %v553, %v557
      %v559 = vlaneseq
      %v560 = vshrl.u32 %v559, 7
      %v561 = vsub.s32 1, %v560
      %v562 = vrot.slane %v553, %v561
      %v565 = vmul.f32 %v550, %v558
      %v566 = vmul.f32 %v551, %v562
      %567 = vst [vmem:[#allocation2 + $0x40] sm:$0xf] %v565
      %568 = vst [vmem:[#allocation2 + $0x48] sm:$0xf] %v566
      %v569 = vld [vmem:[%s2] sm:$0xf]
      %v570 = vld [vmem:[#allocation2] sm:$0xff]
      %v571 = vld [vmem:[#allocation2 + $0x8] sm:$0xff]
      %v572 = vld [vmem:[#allocation2 + $0x10] sm:$0xff]
      %v573 = vld [vmem:[#allocation2 + $0x18] sm:$0xff]
      %v574 = vld [vmem:[#allocation2 + $0x20] sm:$0xff]
      %v575 = vld [vmem:[#allocation2 + $0x28] sm:$0xff]
      %v576 = vld [vmem:[#allocation2 + $0x30] sm:$0xff]
      %v577 = vld [vmem:[#allocation2 + $0x38] sm:$0xff]
      %v578 = vld [vmem:[#allocation2 + $0x40] sm:$0xf]
      %v579 = vld [vmem:[#allocation2 + $0x48] sm:$0xf]
      %v580 = vld [vmem:[%s3] sm:$0xf]
      %582 = vset.pattern.permute.xlu0 0
      %583 = vperm.xlu0 %582, %v580
      %v584 = vpop.permute.xlu0 %583
      %vm586 = vcmask 293888
      %v588 = vsel %vm586, %v569, 0
      %vm590 = vcmask 1043456
      %v592 = vsel %vm590, %v578, 0
      %v595 = vsel %vm590, %v579, 0
      %597 = vmatprep.subr.mxu0 %v571
      %598 = vmatpush1.msra.mxu0 %v570
      %599 = vmatprep.subr.mxu0 %v573
      %600 = vmatpush1.msra.mxu0 %v572
      %601 = vmatprep.subr.mxu0 %v575
      %602 = vmatpush1.msra.mxu0 %v574
      %603 = vmatprep.subr.mxu0 %v577
      %604 = vmatpush1.msra.mxu0 %v576
      %605 = vmatprep.subr.mxu0 %v595
      %606 = vmatpush1.msra.mxu0 %v592
      %607 = vmatprep.subr.mxu0 0.0
      %608 = vmatpush1.msra.mxu0 0.0
      %609 = vmatprep.subr.mxu0 0.0
      %610 = vmatpush1.msra.mxu0 0.0
      %611 = vmatprep.subr.mxu0 0.0
      %612 = vmatpush1.msra.mxu0 0.0
      %613 = vmatprep.subr.mxu0 0.0
      %614 = vmatpush1.msra.mxu0 0.0
      %615 = vmatprep.subr.mxu0 0.0
      %616 = vmatpush1.msra.mxu0 0.0
      %617 = vmatprep.subr.mxu0 0.0
      %618 = vmatpush1.msra.mxu0 0.0
      %619 = vmatprep.subr.mxu0 0.0
      %620 = vmatpush1.msra.mxu0 0.0
      %621 = vmatprep.subr.mxu0 0.0
      %622 = vmatpush1.msra.mxu0 0.0
      %623 = vmatprep.subr.mxu0 0.0
      %624 = vmatpush1.msra.mxu0 0.0
      %625 = vmatprep.subr.mxu0 0.0
      %626 = vmatpush1.msra.mxu0 0.0
      %627 = vmatprep.subr.mxu0 0.0
      %628 = vmatpush1.msra.mxu0 0.0
      %629 = vmatprep.subr.mxu0 0.0
      %630 = vmatpush1.msra.mxu0 0.0
      %631 = vmatprep.subr.mxu0 0.0
      %632 = vmatpush1.msra.mxu0 0.0
      %633 = vmatprep.subr.mxu0 0.0
      %634 = vmatpush1.msra.mxu0 0.0
      %635 = vmatprep.subr.mxu0 0.0
      %636 = vmatpush1.msra.mxu0 0.0
      %637 = vmatprep.subr.mxu0 0.0
      %638 = vmatpush1.msra.mxu0 0.0
      %639 = vmatprep.subr.mxu0 0.0
      %640 = vmatpush1.msra.mxu0 0.0
      %641 = vmatprep.subr.mxu0 0.0
      %642 = vmatpush1.msra.mxu0 0.0
      %643 = vmatprep.subr.mxu0 0.0
      %644 = vmatpush1.msra.mxu0 0.0
      %645 = vmatprep.subr.mxu0 0.0
      %646 = vmatpush1.msra.mxu0 0.0
      %647 = vmatprep.subr.mxu0 0.0
      %648 = vmatpush1.msra.mxu0 0.0
      %649 = vmatprep.subr.mxu0 0.0
      %650 = vmatpush1.msra.mxu0 0.0
      %651 = vmatprep.subr.mxu0 0.0
      %652 = vmatpush1.msra.mxu0 0.0
      %653 = vmatprep.subr.mxu0 0.0
      %654 = vmatpush1.msra.mxu0 0.0
      %655 = vmatprep.subr.mxu0 0.0
      %656 = vmatpush1.msra.mxu0 0.0
      %657 = vmatprep.subr.mxu0 0.0
      %658 = vmatpush1.msra.mxu0 0.0
      %659 = vmatprep.subr.mxu0 0.0
      %660 = vmatpush1.msra.mxu0 0.0
      %661 = vmatprep.mubr.f32.mxu0 0.0
      %662 = vmatmul.mubr.f32.gmra.mrb[0].mxu0 %v588
      %v663 = vpop.f32.mrb[0].mxu0
      %v664 = vadd.f32 %v584, %v663
      %v665 = vpop.f32.mrb[0].mxu0
      %v666 = vadd.f32 %v584, %v665
      %667 = vdwg.mxu0
      %v668 = vxor.u32 %v664, 2147483648
      %v669 = vxor.u32 %v666, 2147483648
      %v670 = vmul.f32 %v668, 1.442695
      %v671 = vpow.pop %v670
      %v672 = vmul.f32 %v669, 1.442695
      %v673 = vpow.pop %v672
      %v674 = vadd.f32 %v671, 1.0
      %v675 = vadd.f32 %v673, 1.0
      %v676 = vrcp.pop %v674
      %v677 = vmul.f32 1.0, %v676
      %v678 = vrcp.pop %v675
      %v679 = vmul.f32 1.0, %v678
      %v680 = vsel %vm590, %v346, 0.0
      %v681 = vsel %vm590, %v348, 0.0
      %v682 = vadd.f32 %v680, %v681
      %683 = vadd.xlane.f32.xlu0 %v682
      %v684 = vpop.xlane.xlu0 %683
      %v685 = vrcp.pop 256.0
      %v686 = vmul.f32 %v684, %v685
      %v687 = vld [vmem:[%s4] sm:$0x3]
      %v688 = vld [vmem:[%s5] sm:$0x3]
      %vm689 = vcmask 31744
      %v691 = vsel %vm689, %v687, 0
      %v694 = vsel %vm590, %v686, 0
      %696 = vmatprep.subr.mxu0 0.0
      %697 = vmatpush1.msra.mxu0 %v694
      %698 = vmatprep.subr.mxu0 0.0
      %699 = vmatpush1.msra.mxu0 0.0
      %700 = vmatprep.subr.mxu0 0.0
      %701 = vmatpush1.msra.mxu0 0.0
      %702 = vmatprep.subr.mxu0 0.0
      %703 = vmatpush1.msra.mxu0 0.0
      %704 = vmatprep.subr.mxu0 0.0
      %705 = vmatpush1.msra.mxu0 0.0
      %706 = vmatprep.subr.mxu0 0.0
      %707 = vmatpush1.msra.mxu0 0.0
      %708 = vmatprep.subr.mxu0 0.0
      %709 = vmatpush1.msra.mxu0 0.0
      %710 = vmatprep.subr.mxu0 0.0
      %711 = vmatpush1.msra.mxu0 0.0
      %712 = vmatprep.subr.mxu0 0.0
      %713 = vmatpush1.msra.mxu0 0.0
      %714 = vmatprep.subr.mxu0 0.0
      %715 = vmatpush1.msra.mxu0 0.0
      %716 = vmatprep.subr.mxu0 0.0
      %717 = vmatpush1.msra.mxu0 0.0
      %718 = vmatprep.subr.mxu0 0.0
      %719 = vmatpush1.msra.mxu0 0.0
      %720 = vmatprep.subr.mxu0 0.0
      %721 = vmatpush1.msra.mxu0 0.0
      %722 = vmatprep.subr.mxu0 0.0
      %723 = vmatpush1.msra.mxu0 0.0
      %724 = vmatprep.subr.mxu0 0.0
      %725 = vmatpush1.msra.mxu0 0.0
      %726 = vmatprep.subr.mxu0 0.0
      %727 = vmatpush1.msra.mxu0 0.0
      %728 = vmatprep.subr.mxu0 0.0
      %729 = vmatpush1.msra.mxu0 0.0
      %730 = vmatprep.subr.mxu0 0.0
      %731 = vmatpush1.msra.mxu0 0.0
      %732 = vmatprep.subr.mxu0 0.0
      %733 = vmatpush1.msra.mxu0 0.0
      %734 = vmatprep.subr.mxu0 0.0
      %735 = vmatpush1.msra.mxu0 0.0
      %736 = vmatprep.subr.mxu0 0.0
      %737 = vmatpush1.msra.mxu0 0.0
      %738 = vmatprep.subr.mxu0 0.0
      %739 = vmatpush1.msra.mxu0 0.0
      %740 = vmatprep.subr.mxu0 0.0
      %741 = vmatpush1.msra.mxu0 0.0
      %742 = vmatprep.subr.mxu0 0.0
      %743 = vmatpush1.msra.mxu0 0.0
      %744 = vmatprep.subr.mxu0 0.0
      %745 = vmatpush1.msra.mxu0 0.0
      %746 = vmatprep.subr.mxu0 0.0
      %747 = vmatpush1.msra.mxu0 0.0
      %748 = vmatprep.subr.mxu0 0.0
      %749 = vmatpush1.msra.mxu0 0.0
      %750 = vmatprep.subr.mxu0 0.0
      %751 = vmatpush1.msra.mxu0 0.0
      %752 = vmatprep.subr.mxu0 0.0
      %753 = vmatpush1.msra.mxu0 0.0
      %754 = vmatprep.subr.mxu0 0.0
      %755 = vmatpush1.msra.mxu0 0.0
      %756 = vmatprep.subr.mxu0 0.0
      %757 = vmatpush1.msra.mxu0 0.0
      %758 = vmatprep.subr.mxu0 0.0
      %759 = vmatpush1.msra.mxu0 0.0
      %760 = vmatprep.mubr.f32.mxu0 0.0
      %761 = vmatmul.mubr.f32.gmra.mrb[0].mxu0 %v691
      %v762 = vpop.f32.mrb[0].mxu0
      %v763 = vadd.f32 %v688, %v762
      %v764 = vpop.f32.mrb[0].mxu0
      %765 = vdwg.mxu0
      %vm766 = vcmp.gt.f32.partialorder %v763, 0.0
      %v767 = vmul.f32 %v763, 0.01
      %v768 = vsel %vm766, %v763, %v767
      %v769 = vld [vmem:[%s6] sm:$0xf]
      %v770 = vld [vmem:[%s7] sm:$0xf]
      %vm771 = vcmask 15360
      %v773 = vsel %vm771, %v769, 0
      %vm775 = vcmask 1041408
      %v777 = vsel %vm775, %v768, 0
      %779 = vmatprep.subr.mxu0 0.0
      %780 = vmatpush1.msra.mxu0 %v777
      %781 = vmatprep.subr.mxu0 0.0
      %782 = vmatpush1.msra.mxu0 0.0
      %783 = vmatprep.subr.mxu0 0.0
      %784 = vmatpush1.msra.mxu0 0.0
      %785 = vmatprep.subr.mxu0 0.0
      %786 = vmatpush1.msra.mxu0 0.0
      %787 = vmatprep.subr.mxu0 0.0
      %788 = vmatpush1.msra.mxu0 0.0
      %789 = vmatprep.subr.mxu0 0.0
      %790 = vmatpush1.msra.mxu0 0.0
      %791 = vmatprep.subr.mxu0 0.0
      %792 = vmatpush1.msra.mxu0 0.0
      %793 = vmatprep.subr.mxu0 0.0
      %794 = vmatpush1.msra.mxu0 0.0
      %795 = vmatprep.subr.mxu0 0.0
      %796 = vmatpush1.msra.mxu0 0.0
      %797 = vmatprep.subr.mxu0 0.0
      %798 = vmatpush1.msra.mxu0 0.0
      %799 = vmatprep.subr.mxu0 0.0
      %800 = vmatpush1.msra.mxu0 0.0
      %801 = vmatprep.subr.mxu0 0.0
      %802 = vmatpush1.msra.mxu0 0.0
      %803 = vmatprep.subr.mxu0 0.0
      %804 = vmatpush1.msra.mxu0 0.0
      %805 = vmatprep.subr.mxu0 0.0
      %806 = vmatpush1.msra.mxu0 0.0
      %807 = vmatprep.subr.mxu0 0.0
      %808 = vmatpush1.msra.mxu0 0.0
      %809 = vmatprep.subr.mxu0 0.0
      %810 = vmatpush1.msra.mxu0 0.0
      %811 = vmatprep.subr.mxu0 0.0
      %812 = vmatpush1.msra.mxu0 0.0
      %813 = vmatprep.subr.mxu0 0.0
      %814 = vmatpush1.msra.mxu0 0.0
      %815 = vmatprep.subr.mxu0 0.0
      %816 = vmatpush1.msra.mxu0 0.0
      %817 = vmatprep.subr.mxu0 0.0
      %818 = vmatpush1.msra.mxu0 0.0
      %819 = vmatprep.subr.mxu0 0.0
      %820 = vmatpush1.msra.mxu0 0.0
      %821 = vmatprep.subr.mxu0 0.0
      %822 = vmatpush1.msra.mxu0 0.0
      %823 = vmatprep.subr.mxu0 0.0
      %824 = vmatpush1.msra.mxu0 0.0
      %825 = vmatprep.subr.mxu0 0.0
      %826 = vmatpush1.msra.mxu0 0.0
      %827 = vmatprep.subr.mxu0 0.0
      %828 = vmatpush1.msra.mxu0 0.0
      %829 = vmatprep.subr.mxu0 0.0
      %830 = vmatpush1.msra.mxu0 0.0
      %831 = vmatprep.subr.mxu0 0.0
      %832 = vmatpush1.msra.mxu0 0.0
      %833 = vmatprep.subr.mxu0 0.0
      %834 = vmatpush1.msra.mxu0 0.0
      %835 = vmatprep.subr.mxu0 0.0
      %836 = vmatpush1.msra.mxu0 0.0
      %837 = vmatprep.subr.mxu0 0.0
      %838 = vmatpush1.msra.mxu0 0.0
      %839 = vmatprep.subr.mxu0 0.0
      %840 = vmatpush1.msra.mxu0 0.0
      %841 = vmatprep.subr.mxu0 0.0
      %842 = vmatpush1.msra.mxu0 0.0
      %843 = vmatprep.mubr.f32.mxu0 0.0
      %844 = vmatmul.mubr.f32.gmra.mrb[0].mxu0 %v773
      %v845 = vpop.f32.mrb[0].mxu0
      %v846 = vadd.f32 %v770, %v845
      %v847 = vpop.f32.mrb[0].mxu0
      %848 = vdwg.mxu0
      %v849 = vxor.u32 %v846, 2147483648
      %v850 = vmul.f32 %v849, 1.442695
      %v851 = vpow.pop %v850
      %v852 = vadd.f32 %v851, 1.0
      %v853 = vrcp.pop %v852
      %v854 = vmul.f32 1.0, %v853
      %856 = vset.pattern.permute.xlu0 0
      %857 = vperm.xlu0 %856, %v854
      %v858 = vpop.permute.xlu0 %857
      %v860 = vadd.f32 %v858, %v677
      %v861 = vadd.f32 %v858, %v679
      %v864 = vcombine.low %v860, %v861
      %v866 = vmul.f32 %v346, %v864
      %v868 = vcombine.high %v866, %v866
      %v870 = vsel %vm590, %v866, -inf
      %v871 = vrot.slane %v870, 4
      %v872 = vmax.f32 %v870, %v871
      %v873 = vrot.slane %v872, 2
      %v874 = vmax.f32 %v872, %v873
      %v875 = vrot.slane %v874, 1
      %v876 = vmax.f32 %v874, %v875
      %v877 = vsel %vm590, %v868, -inf
      %v878 = vrot.slane %v877, 4
      %v879 = vmax.f32 %v877, %v878
      %v880 = vrot.slane %v879, 2
      %v881 = vmax.f32 %v879, %v880
      %v882 = vrot.slane %v881, 1
      %v883 = vmax.f32 %v881, %v882
      %884 = vst [vmem:[%s345] sm:$0xff] %v866
      %v887 = vcombine.low %v876, %v883
      %vm889 = vcmp.eq.f32.partialorder %v866, %v887
      %v890 = vsel %vm889, 1, 0
      %v891 = vcvt.s32.f32 %v890
      %892 = vst [vmem:[%s340] sm:$0xff] %v891
      %p893 = scmp.lt.s32.totalorder %s21, 1
      %s894 = scalar_select %p893, %s21, 1
      %s895 = smul.addr %s894, 2
      %s896 = smul.addr %s895, 4
      %s897 = scalar_lea.vmem %s8, %s896
      %p898 = scmp.lt.s32.totalorder %s21, 1
      %s899 = scalar_select %p898, %s21, 1
      %s900 = smul.addr %s899, 2
      %s901 = smul.addr %s900, 4
      %s902 = scalar_lea.vmem %s9, %s901
      // Predicated region
      $region53: #{scse_mask_forward.1} parent=51 // pred_check
        %p903 = pneg %p212
      $region54: #{scse_mask_forward.1} parent=51 // pred_check_branch
        %905 = sbr.rel (%p903) target = $region56
      $region55: #{scse_mask_forward.1} parent=51 // pred_region
        _
      $region56: #{scse_mask_forward.1} parent=51 // pred_fallthru
        _
      // Predicated region
      $region57: #{scse_mask_forward.1} parent=51 // pred_check
        %p906 = pneg %p238
      $region58: #{scse_mask_forward.1} parent=51 // pred_check_branch
        %908 = sbr.rel (%p906) target = $region60
      $region59: #{scse_mask_forward.1} parent=51 // pred_region
        _
      $region60: #{scse_mask_forward.1} parent=51 // pred_fallthru
        _
    $region52: #{scse_mask_forward.1} parent=5 // pred_fallthru
      _
    %p909 = scmp.le.s32.totalorder 2, %s16
    // Predicated region
    $region61: #{scse_mask_forward.1} parent=5 // pred_check
      %p910 = pneg %p909
    $region62: #{scse_mask_forward.1} parent=5 // pred_check_branch
      %912 = sbr.rel (%p910) target = $region64
    $region63: #{scse_mask_forward.1} parent=5 // pred_region
      %s913 = ssub.s32 %s16, 2
      // Predicated region
      $region65: #{scse_mask_forward.1} parent=63 // pred_check
        %p914 = pneg %p218
      $region66: #{scse_mask_forward.1} parent=63 // pred_check_branch
        %916 = sbr.rel (%p914) target = $region68
      $region67: #{scse_mask_forward.1} parent=63 // pred_region
        %p917 = scmp.lt.s32.totalorder %s22, 1
        %s918 = scalar_select %p917, %s22, 1
        %s919 = smul.addr %s918, 2
        %s920 = smul.addr %s919, 4
        %s921 = scalar_lea.vmem %s8, %s920
      $region68: #{scse_mask_forward.1} parent=63 // pred_fallthru
        _
      // Predicated region
      $region69: #{scse_mask_forward.1} parent=63 // pred_check
        %p922 = pneg %p244
      $region70: #{scse_mask_forward.1} parent=63 // pred_check_branch
        %924 = sbr.rel (%p922) target = $region72
      $region71: #{scse_mask_forward.1} parent=63 // pred_region
        %p925 = scmp.lt.s32.totalorder %s22, 1
        %s926 = scalar_select %p925, %s22, 1
        %s927 = smul.addr %s926, 2
        %s928 = smul.addr %s927, 4
        %s929 = scalar_lea.vmem %s9, %s928
      $region72: #{scse_mask_forward.1} parent=63 // pred_fallthru
        _
    $region64: #{scse_mask_forward.1} parent=5 // pred_fallthru
      _
  $region6: #{scse_mask_forward.1} parent=0 // loop_footer
    %s20 = sadd.s32 1, %s16
  $region7: #{scse_mask_forward.1} parent=0 // loop_footer_branch
    %15 = sbr.rel target = $region3
  $region8: #{scse_mask_forward.1} parent=0 // loop_exit
    _

</llo_original>
